<compile_context>
chip_gen: v7x
topology: tpu7x:2x2x1
jax: 0.10.0
libtpu: 0.0.40
codegen_flags: <defaults>
</compile_context>

<pallas_src>
from functools import partial

import jax
import jax.numpy as jnp
from jax import lax
from jax.experimental import pallas as pl
from jax.experimental.pallas import tpu as pltpu

# ----------------------------- config (synthetic DefaultConfig) --------------
STRIDES = [4, 8, 16, 32, 64]          # small-image friendly strides
CLASS_NUM = 8
SCORE_THR = 0.05
NMS_IOU_THR = 0.6
MAX_DET = 20
ADD_CENTERNESS = True
LANES = 128
MAX_BLOCK_ROWS = 64                   # 64 rows * 128 lanes = 8192 positions / step


# ----------------------------- fused Pallas kernel ----------------------------
def _fused_head_detect_kernel(feats_ref, coords_ref, w_ref, b_ref,
                              score_ref, class_ref, box_ref,
                              *, class_num, p_total, block_rows, add_centerness):
    # feats_ref : (3, block_rows, 128)  VMEM  channel-major, flat positions
    # coords_ref: (2, block_rows, 128)  VMEM  row 0 = x, row 1 = y
    # w_ref     : (3*(C+5),)            SMEM  flattened 1x1-conv weights
    # b_ref     : (C+5,)                SMEM  biases
    # score_ref : (block_rows, 128) f32
    # class_ref : (block_rows, 128) int32
    # box_ref   : (4, block_rows, 128) f32
    x0 = feats_ref[0]                            # (block_rows, 128) — full vregs
    x1 = feats_ref[1]
    x2 = feats_ref[2]

    def head(c):
        # 1x1-conv output channel c == 3 scalar-broadcast FMAs on the VPU.
        base = 3 * c
        return (w_ref[base] * x0 + w_ref[base + 1] * x1
                + w_ref[base + 2] * x2 + b_ref[c])

    # --- class max/argmax on raw logits (sigmoid monotonic => same winner);
    #     one sigmoid on the winning logit instead of class_num sigmoids.
    best = head(0)
    arg = jnp.zeros(best.shape, jnp.int32)
    for c in range(1, class_num):
        lg = head(c)
        upd = lg > best                          # strict > keeps first index on ties
        arg = jnp.where(upd, c, arg)
        best = jnp.where(upd, lg, best)
    maxv = jax.nn.sigmoid(best)                  # score must be sigmoid(max_logit)

    # --- centerness fusion
    cnt = jax.nn.sigmoid(head(class_num))
    score = jnp.sqrt(maxv * cnt) if add_centerness else maxv

    # --- regression (exp) + coords -> boxes
    cx = coords_ref[0]                           # (block_rows, 128)
    cy = coords_ref[1]
    l = jnp.exp(head(class_num + 1))
    t = jnp.exp(head(class_num + 2))
    r = jnp.exp(head(class_num + 3))
    d = jnp.exp(head(class_num + 4))

    # --- mask padded flat positions (they are also sliced off host-side)
    base_pos = pl.program_id(0) * (block_rows * LANES)
    row = lax.broadcasted_iota(jnp.int32, score.shape, 0)
    lane = lax.broadcasted_iota(jnp.int32, score.shape, 1)
    valid = (base_pos + row * LANES + lane) < p_total

    score_ref[...] = jnp.where(valid, score, -1.0)
    class_ref[...] = jnp.where(valid, arg + 1, 0)
    box_ref[0] = cx - l                          # x1
    box_ref[1] = cy - t                          # y1
    box_ref[2] = cx + r                          # x2
    box_ref[3] = cy + d                          # y2


def _plan_blocks(p_total):
    # Choose block_rows (multiple of 8) and padded flat-position count.
    rows = -(-p_total // LANES)
    rows8 = -(-rows // 8) * 8
    if rows8 <= MAX_BLOCK_ROWS:
        block_rows = rows8                       # single grid step (tiny problems)
    else:
        block_rows = MAX_BLOCK_ROWS              # 8192 positions per step
    n_blocks = -(-p_total // (block_rows * LANES))
    if n_blocks > 1 and n_blocks % 2:            # keep v7x's 2 TCs balanced
        n_blocks += 1
    p_pad = n_blocks * block_rows * LANES
    return block_rows, n_blocks, p_pad


def fused_head_detect(feats_flat, coords_flat, w_flat, b, p_total):
    # feats_flat: (3, P) channel-major over flat (batch-major) positions
    # coords_flat: (2, P); w_flat: (3*(C+5),); b: (C+5,)
    c_in, _ = feats_flat.shape
    block_rows, n_blocks, p_pad = _plan_blocks(p_total)
    pad = p_pad - p_total
    if pad:                                      # pad lane axis once, nothing else
        feats_flat = jnp.pad(feats_flat, ((0, 0), (0, pad)))
        coords_flat = jnp.pad(coords_flat, ((0, 0), (0, pad)))
    r_total = p_pad // LANES
    feats_2d = feats_flat.reshape(c_in, r_total, LANES)
    coords_2d = coords_flat.reshape(2, r_total, LANES)

    kernel = partial(_fused_head_detect_kernel, class_num=CLASS_NUM,
                     p_total=p_total, block_rows=block_rows,
                     add_centerness=ADD_CENTERNESS)
    scores, classes, boxes = pl.pallas_call(
        kernel,
        out_shape=(jax.ShapeDtypeStruct((r_total, LANES), jnp.float32),     # scores
                   jax.ShapeDtypeStruct((r_total, LANES), jnp.int32),       # classes
                   jax.ShapeDtypeStruct((4, r_total, LANES), jnp.float32)), # boxes
        grid=(n_blocks,),
        in_specs=[pl.BlockSpec((c_in, block_rows, LANES), lambda i: (0, i, 0)),
                  pl.BlockSpec((2, block_rows, LANES), lambda i: (0, i, 0)),
                  pl.BlockSpec(memory_space=pltpu.MemorySpace.SMEM),
                  pl.BlockSpec(memory_space=pltpu.MemorySpace.SMEM)],
        out_specs=(pl.BlockSpec((block_rows, LANES), lambda i: (i, 0)),
                   pl.BlockSpec((block_rows, LANES), lambda i: (i, 0)),
                   pl.BlockSpec((4, block_rows, LANES), lambda i: (0, i, 0))),
        compiler_params=pltpu.CompilerParams(
            dimension_semantics=("parallel",)),
    )(feats_2d, coords_2d, w_flat, b)
    return scores, classes, boxes


# ----------------------------- glue (plain JAX) --------------------------------
def coords_fmap2orig(h, w, stride):
    # standard FCOS coordinate generation (x, y) + stride // 2
    shifts_x = jnp.arange(0, w * stride, stride, dtype=jnp.float32)
    shifts_y = jnp.arange(0, h * stride, stride, dtype=jnp.float32)
    sy, sx = jnp.meshgrid(shifts_y, shifts_x, indexing="ij")
    coords = jnp.stack([sx.reshape(-1), sy.reshape(-1)], axis=-1) + stride // 2
    return coords  # (h*w, 2)


def fcos_body_features(imgs):
    # imgs: (B, 3, H, W) NCHW. Synthetic stand-in for backbone+FPN+SASPP+RFP:
    # per-stride block mean-pool. Built channel-major directly (transpose the
    # tiny raw image once, before any feature expansion) so no full-feature
    # transpose/pad precedes the kernel.
    bsz, cin, hh, ww = imgs.shape
    imgs_cf = jnp.transpose(imgs, (1, 0, 2, 3))                        # (C,B,H,W)
    feats, coords_all = [], []
    for s in STRIDES:
        h, w = hh // s, ww // s
        f = imgs_cf.reshape(cin, bsz, h, s, w, s).mean(axis=(3, 5))    # (C,B,h,w)
        feats.append(f.reshape(cin, bsz, h * w))                       # row-major (y,x)
        coords_all.append(coords_fmap2orig(h, w, s))
    feats = jnp.concatenate(feats, axis=2)                 # (C, B, N)  == cat(dim=1)
    coords = jnp.concatenate(coords_all, axis=0).T         # (2, N)     == cat(dim=0)
    n_per_batch = feats.shape[2]
    p_total = bsz * n_per_batch
    feats_flat = feats.reshape(cin, p_total)               # contiguous, batch-major
    coords_flat = jnp.tile(coords, (1, bsz))               # same coords per batch
    return feats_flat, coords_flat, n_per_batch, p_total


def _pairwise_iou(b):
    # (K,4) boxes, +1 area convention of the reference box_nms.
    x1, y1, x2, y2 = b[:, 0], b[:, 1], b[:, 2], b[:, 3]
    area = (x2 - x1 + 1.0) * (y2 - y1 + 1.0)
    xmin = jnp.maximum(x1[:, None], x1[None, :])
    ymin = jnp.maximum(y1[:, None], y1[None, :])
    xmax = jnp.minimum(x2[:, None], x2[None, :])
    ymax = jnp.minimum(y2[:, None], y2[None, :])
    inter = jnp.maximum(xmax - xmin, 0.0) * jnp.maximum(ymax - ymin, 0.0)
    return inter / (area[:, None] + area[None, :] - inter)


def _nms_suppress(iou, valid):
    # greedy NMS over score-sorted candidates (matches DetectHead.box_nms)
    _, k, _ = iou.shape
    idx = jnp.arange(k)

    def per_batch(iou_b, valid_b):
        def body(i, keep):
            keep_i = keep[i] & valid_b[i]
            suppress = (iou_b[i] > NMS_IOU_THR) & (idx > i) & keep_i
            return keep & (~suppress)
        return lax.fori_loop(0, k, body, valid_b)

    return jax.vmap(per_batch)(iou, valid)


def post_process(scores, classes, boxes):
    # scores (B,K) desc-sorted, classes (B,K) int32, boxes (B,K,4). Plain XLA —
    # K=20, a Pallas kernel here is pure launch overhead.
    valid = scores >= SCORE_THR
    max_coord = jnp.max(jnp.where(valid[..., None], boxes, 0.0), axis=(1, 2))  # (B,)
    offsets = classes.astype(boxes.dtype) * (max_coord[:, None] + 1.0)
    boxes_for_nms = boxes + offsets[..., None]
    iou = jax.vmap(_pairwise_iou)(boxes_for_nms)
    keep = _nms_suppress(iou, valid)
    # TODO(synk): PyTorch returns variable-length kept detections per batch;
    # kept entries are compacted to the front and the rest masked
    # (score=0, class=-1, box=0) to keep shapes static.
    order = jnp.argsort((~keep).astype(jnp.int32), axis=1, stable=True)
    keep_s = jnp.take_along_axis(keep, order, axis=1)
    scores_o = jnp.where(keep_s, jnp.take_along_axis(scores, order, axis=1), 0.0)
    classes_o = jnp.where(keep_s, jnp.take_along_axis(classes, order, axis=1), -1)
    boxes_o = jnp.where(keep_s[..., None],
                        jnp.take_along_axis(boxes, order[..., None], axis=1), 0.0)
    return scores_o, classes_o, boxes_o


def detect_head_post(scores_2d, classes_2d, boxes_3d, bsz, n_per_batch, p_total,
                     img_h, img_w):
    # scores_2d/classes_2d: (R,128); boxes_3d: (4,R,128). Strip lane padding
    # (a few KB) and recover the per-batch (B, N) views.
    scores = scores_2d.reshape(-1)[:p_total].reshape(bsz, n_per_batch)
    classes = classes_2d.reshape(-1)[:p_total].reshape(bsz, n_per_batch)
    boxes = boxes_3d.reshape(4, -1)[:, :p_total].reshape(4, bsz, n_per_batch)
    boxes = jnp.transpose(boxes, (1, 2, 0))                         # (B, N, 4)

    max_num = min(MAX_DET, n_per_batch)
    topk_scores, topk_ind = lax.top_k(scores, max_num)              # sorted desc
    classes_topk = jnp.take_along_axis(classes, topk_ind, axis=1)
    boxes_topk = jnp.take_along_axis(boxes, topk_ind[..., None], axis=1)
    scores_o, classes_o, boxes_o = post_process(topk_scores, classes_topk, boxes_topk)
    # ClipBoxes: clamp(min=0), x -> [0, w-1], y -> [0, h-1]  (plain XLA, tiny)
    lim = jnp.array([img_w - 1, img_h - 1, img_w - 1, img_h - 1], dtype=boxes_o.dtype)
    boxes_o = jnp.minimum(jnp.maximum(boxes_o, 0.0), lim)
    return scores_o, classes_o, boxes_o


@jax.jit
def fcos_detector_inference(params, batch_imgs):
    bsz = batch_imgs.shape[0]
    feats_flat, coords_flat, n_per_batch, p_total = fcos_body_features(batch_imgs)
    scores_2d, classes_2d, boxes_3d = fused_head_detect(
        feats_flat, coords_flat, params["w"].reshape(-1), params["b"], p_total)
    return detect_head_post(scores_2d, classes_2d, boxes_3d, bsz, n_per_batch,
                            p_total, batch_imgs.shape[2], batch_imgs.shape[3])


# ----------------------------- main --------------------------------------------
if __name__ == "__main__":
    key = jax.random.PRNGKey(0)
    k_img, k_w, k_b = jax.random.split(key, 3)
    batch_imgs = jax.random.normal(k_img, (2, 3, 64, 64), dtype=jnp.float32)
    params = {
        # 1x1-conv head weights: (out_channels = C+1+4, in_channels = 3)
        "w": 0.5 * jax.random.normal(k_w, (CLASS_NUM + 5, 3), dtype=jnp.float32),
        "b": 0.1 * jax.random.normal(k_b, (CLASS_NUM + 5,), dtype=jnp.float32),
    }
    scores, classes, boxes = fcos_detector_inference(params, batch_imgs)
    jax.block_until_ready((scores, classes, boxes))
    assert scores.shape == (2, MAX_DET)
    assert classes.shape == (2, MAX_DET)
    assert boxes.shape == (2, MAX_DET, 4)
    print("KERNEL_OK")
</pallas_src>

<mosaic_0001>
module attributes {stable_mosaic.version = 11 : i64} {
  func.func @_fused_head_detect_kernel(%arg0: i32, %arg1: memref<3x8x128xf32, #tpu.memory_space<vmem>>, %arg2: memref<2x8x128xf32, #tpu.memory_space<vmem>>, %arg3: memref<39xf32, #tpu.memory_space<smem>>, %arg4: memref<13xf32, #tpu.memory_space<smem>>, %arg5: memref<8x128xf32, #tpu.memory_space<vmem>>, %arg6: memref<8x128xi32, #tpu.memory_space<vmem>>, %arg7: memref<4x8x128xf32, #tpu.memory_space<vmem>>) attributes {dimension_semantics = [#tpu.dimension_semantics<parallel>], iteration_bounds = array<i64: 1>, scalar_prefetch = 0 : i64, scratch_operands = 0 : i64, tpu.core_type = #tpu.core_type<tc>, window_params = [{transform_indices = @transform_0, window_bounds = array<i64: 3, 8, 128>}, {transform_indices = @transform_1, window_bounds = array<i64: 2, 8, 128>}, {transform_indices = @transform_2, window_bounds = array<i64: 39>}, {transform_indices = @transform_3, window_bounds = array<i64: 13>}, {transform_indices = @transform_4, window_bounds = array<i64: 8, 128>}, {transform_indices = @transform_5, window_bounds = array<i64: 8, 128>}, {transform_indices = @transform_6, window_bounds = array<i64: 4, 8, 128>}]} {
    %c0 = arith.constant 0 : index
    %c0_0 = arith.constant 0 : index
    %c0_1 = arith.constant 0 : index
    %0 = vector.load %arg1[%c0, %c0_0, %c0_1] : memref<3x8x128xf32, #tpu.memory_space<vmem>>, vector<1x8x128xf32>
    %1 = vector.shape_cast %0 : vector<1x8x128xf32> to vector<8x128xf32>
    %c1 = arith.constant 1 : index
    %c0_2 = arith.constant 0 : index
    %c0_3 = arith.constant 0 : index
    %2 = vector.load %arg1[%c1, %c0_2, %c0_3] : memref<3x8x128xf32, #tpu.memory_space<vmem>>, vector<1x8x128xf32>
    %3 = vector.shape_cast %2 : vector<1x8x128xf32> to vector<8x128xf32>
    %c2 = arith.constant 2 : index
    %c0_4 = arith.constant 0 : index
    %c0_5 = arith.constant 0 : index
    %4 = vector.load %arg1[%c2, %c0_4, %c0_5] : memref<3x8x128xf32, #tpu.memory_space<vmem>>, vector<1x8x128xf32>
    %5 = vector.shape_cast %4 : vector<1x8x128xf32> to vector<8x128xf32>
    %c0_6 = arith.constant 0 : index
    %6 = memref.load %arg3[%c0_6] : memref<39xf32, #tpu.memory_space<smem>>
    %7 = vector.broadcast %6 : f32 to vector<8x128xf32>
    %8 = arith.mulf %7, %1 : vector<8x128xf32>
    %c1_7 = arith.constant 1 : index
    %9 = memref.load %arg3[%c1_7] : memref<39xf32, #tpu.memory_space<smem>>
    %10 = vector.broadcast %9 : f32 to vector<8x128xf32>
    %11 = arith.mulf %10, %3 : vector<8x128xf32>
    %12 = arith.addf %8, %11 : vector<8x128xf32>
    %c2_8 = arith.constant 2 : index
    %13 = memref.load %arg3[%c2_8] : memref<39xf32, #tpu.memory_space<smem>>
    %14 = vector.broadcast %13 : f32 to vector<8x128xf32>
    %15 = arith.mulf %14, %5 : vector<8x128xf32>
    %16 = arith.addf %12, %15 : vector<8x128xf32>
    %c0_9 = arith.constant 0 : index
    %17 = memref.load %arg4[%c0_9] : memref<13xf32, #tpu.memory_space<smem>>
    %18 = vector.broadcast %17 : f32 to vector<8x128xf32>
    %19 = arith.addf %16, %18 : vector<8x128xf32>
    %c0_i32 = arith.constant 0 : i32
    %20 = vector.broadcast %c0_i32 : i32 to vector<8x128xi32>
    %c3 = arith.constant 3 : index
    %21 = memref.load %arg3[%c3] : memref<39xf32, #tpu.memory_space<smem>>
    %22 = vector.broadcast %21 : f32 to vector<8x128xf32>
    %23 = arith.mulf %22, %1 : vector<8x128xf32>
    %c4 = arith.constant 4 : index
    %24 = memref.load %arg3[%c4] : memref<39xf32, #tpu.memory_space<smem>>
    %25 = vector.broadcast %24 : f32 to vector<8x128xf32>
    %26 = arith.mulf %25, %3 : vector<8x128xf32>
    %27 = arith.addf %23, %26 : vector<8x128xf32>
    %c5 = arith.constant 5 : index
    %28 = memref.load %arg3[%c5] : memref<39xf32, #tpu.memory_space<smem>>
    %29 = vector.broadcast %28 : f32 to vector<8x128xf32>
    %30 = arith.mulf %29, %5 : vector<8x128xf32>
    %31 = arith.addf %27, %30 : vector<8x128xf32>
    %c1_10 = arith.constant 1 : index
    %32 = memref.load %arg4[%c1_10] : memref<13xf32, #tpu.memory_space<smem>>
    %33 = vector.broadcast %32 : f32 to vector<8x128xf32>
    %34 = arith.addf %31, %33 : vector<8x128xf32>
    %35 = arith.cmpf ogt, %34, %19 : vector<8x128xf32>
    %c1_i32 = arith.constant 1 : i32
    %36 = vector.broadcast %c1_i32 : i32 to vector<8x128xi32>
    %37 = arith.select %35, %36, %20 : vector<8x128xi1>, vector<8x128xi32>
    %38 = arith.select %35, %34, %19 : vector<8x128xi1>, vector<8x128xf32>
    %c6 = arith.constant 6 : index
    %39 = memref.load %arg3[%c6] : memref<39xf32, #tpu.memory_space<smem>>
    %40 = vector.broadcast %39 : f32 to vector<8x128xf32>
    %41 = arith.mulf %40, %1 : vector<8x128xf32>
    %c7 = arith.constant 7 : index
    %42 = memref.load %arg3[%c7] : memref<39xf32, #tpu.memory_space<smem>>
    %43 = vector.broadcast %42 : f32 to vector<8x128xf32>
    %44 = arith.mulf %43, %3 : vector<8x128xf32>
    %45 = arith.addf %41, %44 : vector<8x128xf32>
    %c8 = arith.constant 8 : index
    %46 = memref.load %arg3[%c8] : memref<39xf32, #tpu.memory_space<smem>>
    %47 = vector.broadcast %46 : f32 to vector<8x128xf32>
    %48 = arith.mulf %47, %5 : vector<8x128xf32>
    %49 = arith.addf %45, %48 : vector<8x128xf32>
    %c2_11 = arith.constant 2 : index
    %50 = memref.load %arg4[%c2_11] : memref<13xf32, #tpu.memory_space<smem>>
    %51 = vector.broadcast %50 : f32 to vector<8x128xf32>
    %52 = arith.addf %49, %51 : vector<8x128xf32>
    %53 = arith.cmpf ogt, %52, %38 : vector<8x128xf32>
    %c2_i32 = arith.constant 2 : i32
    %54 = vector.broadcast %c2_i32 : i32 to vector<8x128xi32>
    %55 = arith.select %53, %54, %37 : vector<8x128xi1>, vector<8x128xi32>
    %56 = arith.select %53, %52, %38 : vector<8x128xi1>, vector<8x128xf32>
    %c9 = arith.constant 9 : index
    %57 = memref.load %arg3[%c9] : memref<39xf32, #tpu.memory_space<smem>>
    %58 = vector.broadcast %57 : f32 to vector<8x128xf32>
    %59 = arith.mulf %58, %1 : vector<8x128xf32>
    %c10 = arith.constant 10 : index
    %60 = memref.load %arg3[%c10] : memref<39xf32, #tpu.memory_space<smem>>
    %61 = vector.broadcast %60 : f32 to vector<8x128xf32>
    %62 = arith.mulf %61, %3 : vector<8x128xf32>
    %63 = arith.addf %59, %62 : vector<8x128xf32>
    %c11 = arith.constant 11 : index
    %64 = memref.load %arg3[%c11] : memref<39xf32, #tpu.memory_space<smem>>
    %65 = vector.broadcast %64 : f32 to vector<8x128xf32>
    %66 = arith.mulf %65, %5 : vector<8x128xf32>
    %67 = arith.addf %63, %66 : vector<8x128xf32>
    %c3_12 = arith.constant 3 : index
    %68 = memref.load %arg4[%c3_12] : memref<13xf32, #tpu.memory_space<smem>>
    %69 = vector.broadcast %68 : f32 to vector<8x128xf32>
    %70 = arith.addf %67, %69 : vector<8x128xf32>
    %71 = arith.cmpf ogt, %70, %56 : vector<8x128xf32>
    %c3_i32 = arith.constant 3 : i32
    %72 = vector.broadcast %c3_i32 : i32 to vector<8x128xi32>
    %73 = arith.select %71, %72, %55 : vector<8x128xi1>, vector<8x128xi32>
    %74 = arith.select %71, %70, %56 : vector<8x128xi1>, vector<8x128xf32>
    %c12 = arith.constant 12 : index
    %75 = memref.load %arg3[%c12] : memref<39xf32, #tpu.memory_space<smem>>
    %76 = vector.broadcast %75 : f32 to vector<8x128xf32>
    %77 = arith.mulf %76, %1 : vector<8x128xf32>
    %c13 = arith.constant 13 : index
    %78 = memref.load %arg3[%c13] : memref<39xf32, #tpu.memory_space<smem>>
    %79 = vector.broadcast %78 : f32 to vector<8x128xf32>
    %80 = arith.mulf %79, %3 : vector<8x128xf32>
    %81 = arith.addf %77, %80 : vector<8x128xf32>
    %c14 = arith.constant 14 : index
    %82 = memref.load %arg3[%c14] : memref<39xf32, #tpu.memory_space<smem>>
    %83 = vector.broadcast %82 : f32 to vector<8x128xf32>
    %84 = arith.mulf %83, %5 : vector<8x128xf32>
    %85 = arith.addf %81, %84 : vector<8x128xf32>
    %c4_13 = arith.constant 4 : index
    %86 = memref.load %arg4[%c4_13] : memref<13xf32, #tpu.memory_space<smem>>
    %87 = vector.broadcast %86 : f32 to vector<8x128xf32>
    %88 = arith.addf %85, %87 : vector<8x128xf32>
    %89 = arith.cmpf ogt, %88, %74 : vector<8x128xf32>
    %c4_i32 = arith.constant 4 : i32
    %90 = vector.broadcast %c4_i32 : i32 to vector<8x128xi32>
    %91 = arith.select %89, %90, %73 : vector<8x128xi1>, vector<8x128xi32>
    %92 = arith.select %89, %88, %74 : vector<8x128xi1>, vector<8x128xf32>
    %c15 = arith.constant 15 : index
    %93 = memref.load %arg3[%c15] : memref<39xf32, #tpu.memory_space<smem>>
    %94 = vector.broadcast %93 : f32 to vector<8x128xf32>
    %95 = arith.mulf %94, %1 : vector<8x128xf32>
    %c16 = arith.constant 16 : index
    %96 = memref.load %arg3[%c16] : memref<39xf32, #tpu.memory_space<smem>>
    %97 = vector.broadcast %96 : f32 to vector<8x128xf32>
    %98 = arith.mulf %97, %3 : vector<8x128xf32>
    %99 = arith.addf %95, %98 : vector<8x128xf32>
    %c17 = arith.constant 17 : index
    %100 = memref.load %arg3[%c17] : memref<39xf32, #tpu.memory_space<smem>>
    %101 = vector.broadcast %100 : f32 to vector<8x128xf32>
    %102 = arith.mulf %101, %5 : vector<8x128xf32>
    %103 = arith.addf %99, %102 : vector<8x128xf32>
    %c5_14 = arith.constant 5 : index
    %104 = memref.load %arg4[%c5_14] : memref<13xf32, #tpu.memory_space<smem>>
    %105 = vector.broadcast %104 : f32 to vector<8x128xf32>
    %106 = arith.addf %103, %105 : vector<8x128xf32>
    %107 = arith.cmpf ogt, %106, %92 : vector<8x128xf32>
    %c5_i32 = arith.constant 5 : i32
    %108 = vector.broadcast %c5_i32 : i32 to vector<8x128xi32>
    %109 = arith.select %107, %108, %91 : vector<8x128xi1>, vector<8x128xi32>
    %110 = arith.select %107, %106, %92 : vector<8x128xi1>, vector<8x128xf32>
    %c18 = arith.constant 18 : index
    %111 = memref.load %arg3[%c18] : memref<39xf32, #tpu.memory_space<smem>>
    %112 = vector.broadcast %111 : f32 to vector<8x128xf32>
    %113 = arith.mulf %112, %1 : vector<8x128xf32>
    %c19 = arith.constant 19 : index
    %114 = memref.load %arg3[%c19] : memref<39xf32, #tpu.memory_space<smem>>
    %115 = vector.broadcast %114 : f32 to vector<8x128xf32>
    %116 = arith.mulf %115, %3 : vector<8x128xf32>
    %117 = arith.addf %113, %116 : vector<8x128xf32>
    %c20 = arith.constant 20 : index
    %118 = memref.load %arg3[%c20] : memref<39xf32, #tpu.memory_space<smem>>
    %119 = vector.broadcast %118 : f32 to vector<8x128xf32>
    %120 = arith.mulf %119, %5 : vector<8x128xf32>
    %121 = arith.addf %117, %120 : vector<8x128xf32>
    %c6_15 = arith.constant 6 : index
    %122 = memref.load %arg4[%c6_15] : memref<13xf32, #tpu.memory_space<smem>>
    %123 = vector.broadcast %122 : f32 to vector<8x128xf32>
    %124 = arith.addf %121, %123 : vector<8x128xf32>
    %125 = arith.cmpf ogt, %124, %110 : vector<8x128xf32>
    %c6_i32 = arith.constant 6 : i32
    %126 = vector.broadcast %c6_i32 : i32 to vector<8x128xi32>
    %127 = arith.select %125, %126, %109 : vector<8x128xi1>, vector<8x128xi32>
    %128 = arith.select %125, %124, %110 : vector<8x128xi1>, vector<8x128xf32>
    %c21 = arith.constant 21 : index
    %129 = memref.load %arg3[%c21] : memref<39xf32, #tpu.memory_space<smem>>
    %130 = vector.broadcast %129 : f32 to vector<8x128xf32>
    %131 = arith.mulf %130, %1 : vector<8x128xf32>
    %c22 = arith.constant 22 : index
    %132 = memref.load %arg3[%c22] : memref<39xf32, #tpu.memory_space<smem>>
    %133 = vector.broadcast %132 : f32 to vector<8x128xf32>
    %134 = arith.mulf %133, %3 : vector<8x128xf32>
    %135 = arith.addf %131, %134 : vector<8x128xf32>
    %c23 = arith.constant 23 : index
    %136 = memref.load %arg3[%c23] : memref<39xf32, #tpu.memory_space<smem>>
    %137 = vector.broadcast %136 : f32 to vector<8x128xf32>
    %138 = arith.mulf %137, %5 : vector<8x128xf32>
    %139 = arith.addf %135, %138 : vector<8x128xf32>
    %c7_16 = arith.constant 7 : index
    %140 = memref.load %arg4[%c7_16] : memref<13xf32, #tpu.memory_space<smem>>
    %141 = vector.broadcast %140 : f32 to vector<8x128xf32>
    %142 = arith.addf %139, %141 : vector<8x128xf32>
    %143 = arith.cmpf ogt, %142, %128 : vector<8x128xf32>
    %c7_i32 = arith.constant 7 : i32
    %144 = vector.broadcast %c7_i32 : i32 to vector<8x128xi32>
    %145 = arith.select %143, %144, %127 : vector<8x128xi1>, vector<8x128xi32>
    %146 = arith.select %143, %142, %128 : vector<8x128xi1>, vector<8x128xf32>
    %147 = arith.negf %146 : vector<8x128xf32>
    %148 = math.exp %147 : vector<8x128xf32>
    %cst = arith.constant 1.000000e+00 : f32
    %149 = vector.broadcast %cst : f32 to vector<8x128xf32>
    %150 = arith.addf %149, %148 : vector<8x128xf32>
    %151 = arith.divf %149, %150 : vector<8x128xf32>
    %c24 = arith.constant 24 : index
    %152 = memref.load %arg3[%c24] : memref<39xf32, #tpu.memory_space<smem>>
    %153 = vector.broadcast %152 : f32 to vector<8x128xf32>
    %154 = arith.mulf %153, %1 : vector<8x128xf32>
    %c25 = arith.constant 25 : index
    %155 = memref.load %arg3[%c25] : memref<39xf32, #tpu.memory_space<smem>>
    %156 = vector.broadcast %155 : f32 to vector<8x128xf32>
    %157 = arith.mulf %156, %3 : vector<8x128xf32>
    %158 = arith.addf %154, %157 : vector<8x128xf32>
    %c26 = arith.constant 26 : index
    %159 = memref.load %arg3[%c26] : memref<39xf32, #tpu.memory_space<smem>>
    %160 = vector.broadcast %159 : f32 to vector<8x128xf32>
    %161 = arith.mulf %160, %5 : vector<8x128xf32>
    %162 = arith.addf %158, %161 : vector<8x128xf32>
    %c8_17 = arith.constant 8 : index
    %163 = memref.load %arg4[%c8_17] : memref<13xf32, #tpu.memory_space<smem>>
    %164 = vector.broadcast %163 : f32 to vector<8x128xf32>
    %165 = arith.addf %162, %164 : vector<8x128xf32>
    %166 = arith.negf %165 : vector<8x128xf32>
    %167 = math.exp %166 : vector<8x128xf32>
    %cst_18 = arith.constant 1.000000e+00 : f32
    %168 = vector.broadcast %cst_18 : f32 to vector<8x128xf32>
    %169 = arith.addf %168, %167 : vector<8x128xf32>
    %170 = arith.divf %168, %169 : vector<8x128xf32>
    %171 = arith.mulf %151, %170 : vector<8x128xf32>
    %172 = math.sqrt %171 : vector<8x128xf32>
    %c0_19 = arith.constant 0 : index
    %c0_20 = arith.constant 0 : index
    %c0_21 = arith.constant 0 : index
    %173 = vector.load %arg2[%c0_19, %c0_20, %c0_21] : memref<2x8x128xf32, #tpu.memory_space<vmem>>, vector<1x8x128xf32>
    %174 = vector.shape_cast %173 : vector<1x8x128xf32> to vector<8x128xf32>
    %c1_22 = arith.constant 1 : index
    %c0_23 = arith.constant 0 : index
    %c0_24 = arith.constant 0 : index
    %175 = vector.load %arg2[%c1_22, %c0_23, %c0_24] : memref<2x8x128xf32, #tpu.memory_space<vmem>>, vector<1x8x128xf32>
    %176 = vector.shape_cast %175 : vector<1x8x128xf32> to vector<8x128xf32>
    %c27 = arith.constant 27 : index
    %177 = memref.load %arg3[%c27] : memref<39xf32, #tpu.memory_space<smem>>
    %178 = vector.broadcast %177 : f32 to vector<8x128xf32>
    %179 = arith.mulf %178, %1 : vector<8x128xf32>
    %c28 = arith.constant 28 : index
    %180 = memref.load %arg3[%c28] : memref<39xf32, #tpu.memory_space<smem>>
    %181 = vector.broadcast %180 : f32 to vector<8x128xf32>
    %182 = arith.mulf %181, %3 : vector<8x128xf32>
    %183 = arith.addf %179, %182 : vector<8x128xf32>
    %c29 = arith.constant 29 : index
    %184 = memref.load %arg3[%c29] : memref<39xf32, #tpu.memory_space<smem>>
    %185 = vector.broadcast %184 : f32 to vector<8x128xf32>
    %186 = arith.mulf %185, %5 : vector<8x128xf32>
    %187 = arith.addf %183, %186 : vector<8x128xf32>
    %c9_25 = arith.constant 9 : index
    %188 = memref.load %arg4[%c9_25] : memref<13xf32, #tpu.memory_space<smem>>
    %189 = vector.broadcast %188 : f32 to vector<8x128xf32>
    %190 = arith.addf %187, %189 : vector<8x128xf32>
    %191 = math.exp %190 : vector<8x128xf32>
    %c30 = arith.constant 30 : index
    %192 = memref.load %arg3[%c30] : memref<39xf32, #tpu.memory_space<smem>>
    %193 = vector.broadcast %192 : f32 to vector<8x128xf32>
    %194 = arith.mulf %193, %1 : vector<8x128xf32>
    %c31 = arith.constant 31 : index
    %195 = memref.load %arg3[%c31] : memref<39xf32, #tpu.memory_space<smem>>
    %196 = vector.broadcast %195 : f32 to vector<8x128xf32>
    %197 = arith.mulf %196, %3 : vector<8x128xf32>
    %198 = arith.addf %194, %197 : vector<8x128xf32>
    %c32 = arith.constant 32 : index
    %199 = memref.load %arg3[%c32] : memref<39xf32, #tpu.memory_space<smem>>
    %200 = vector.broadcast %199 : f32 to vector<8x128xf32>
    %201 = arith.mulf %200, %5 : vector<8x128xf32>
    %202 = arith.addf %198, %201 : vector<8x128xf32>
    %c10_26 = arith.constant 10 : index
    %203 = memref.load %arg4[%c10_26] : memref<13xf32, #tpu.memory_space<smem>>
    %204 = vector.broadcast %203 : f32 to vector<8x128xf32>
    %205 = arith.addf %202, %204 : vector<8x128xf32>
    %206 = math.exp %205 : vector<8x128xf32>
    %c33 = arith.constant 33 : index
    %207 = memref.load %arg3[%c33] : memref<39xf32, #tpu.memory_space<smem>>
    %208 = vector.broadcast %207 : f32 to vector<8x128xf32>
    %209 = arith.mulf %208, %1 : vector<8x128xf32>
    %c34 = arith.constant 34 : index
    %210 = memref.load %arg3[%c34] : memref<39xf32, #tpu.memory_space<smem>>
    %211 = vector.broadcast %210 : f32 to vector<8x128xf32>
    %212 = arith.mulf %211, %3 : vector<8x128xf32>
    %213 = arith.addf %209, %212 : vector<8x128xf32>
    %c35 = arith.constant 35 : index
    %214 = memref.load %arg3[%c35] : memref<39xf32, #tpu.memory_space<smem>>
    %215 = vector.broadcast %214 : f32 to vector<8x128xf32>
    %216 = arith.mulf %215, %5 : vector<8x128xf32>
    %217 = arith.addf %213, %216 : vector<8x128xf32>
    %c11_27 = arith.constant 11 : index
    %218 = memref.load %arg4[%c11_27] : memref<13xf32, #tpu.memory_space<smem>>
    %219 = vector.broadcast %218 : f32 to vector<8x128xf32>
    %220 = arith.addf %217, %219 : vector<8x128xf32>
    %221 = math.exp %220 : vector<8x128xf32>
    %c36 = arith.constant 36 : index
    %222 = memref.load %arg3[%c36] : memref<39xf32, #tpu.memory_space<smem>>
    %223 = vector.broadcast %222 : f32 to vector<8x128xf32>
    %224 = arith.mulf %223, %1 : vector<8x128xf32>
    %c37 = arith.constant 37 : index
    %225 = memref.load %arg3[%c37] : memref<39xf32, #tpu.memory_space<smem>>
    %226 = vector.broadcast %225 : f32 to vector<8x128xf32>
    %227 = arith.mulf %226, %3 : vector<8x128xf32>
    %228 = arith.addf %224, %227 : vector<8x128xf32>
    %c38 = arith.constant 38 : index
    %229 = memref.load %arg3[%c38] : memref<39xf32, #tpu.memory_space<smem>>
    %230 = vector.broadcast %229 : f32 to vector<8x128xf32>
    %231 = arith.mulf %230, %5 : vector<8x128xf32>
    %232 = arith.addf %228, %231 : vector<8x128xf32>
    %c12_28 = arith.constant 12 : index
    %233 = memref.load %arg4[%c12_28] : memref<13xf32, #tpu.memory_space<smem>>
    %234 = vector.broadcast %233 : f32 to vector<8x128xf32>
    %235 = arith.addf %232, %234 : vector<8x128xf32>
    %236 = math.exp %235 : vector<8x128xf32>
    %c1024_i32 = arith.constant 1024 : i32
    %237 = arith.muli %arg0, %c1024_i32 : i32
    %238 = tpu.iota {dimensions = array<i32: 0>} : vector<8x128xi32>
    %239 = tpu.iota {dimensions = array<i32: 1>} : vector<8x128xi32>
    %c128_i32 = arith.constant 128 : i32
    %240 = vector.broadcast %c128_i32 : i32 to vector<8x128xi32>
    %241 = arith.muli %238, %240 : vector<8x128xi32>
    %242 = vector.broadcast %237 : i32 to vector<8x128xi32>
    %243 = arith.addi %242, %241 : vector<8x128xi32>
    %244 = arith.addi %243, %239 : vector<8x128xi32>
    %c682_i32 = arith.constant 682 : i32
    %245 = vector.broadcast %c682_i32 : i32 to vector<8x128xi32>
    %246 = arith.cmpi slt, %244, %245 : vector<8x128xi32>
    %cst_29 = arith.constant -1.000000e+00 : f32
    %247 = vector.broadcast %cst_29 : f32 to vector<8x128xf32>
    %248 = arith.select %246, %172, %247 : vector<8x128xi1>, vector<8x128xf32>
    %c0_30 = arith.constant 0 : index
    %c0_31 = arith.constant 0 : index
    %249 = vector.load %arg5[%c0_30, %c0_31] : memref<8x128xf32, #tpu.memory_space<vmem>>, vector<8x128xf32>
    tpu.vector_store %arg5[%c0_30, %c0_31], %248 {strides = array<i32>} : memref<8x128xf32, #tpu.memory_space<vmem>>, vector<8x128xf32>,
    %c1_i32_32 = arith.constant 1 : i32
    %250 = vector.broadcast %c1_i32_32 : i32 to vector<8x128xi32>
    %251 = arith.addi %145, %250 : vector<8x128xi32>
    %c0_i32_33 = arith.constant 0 : i32
    %252 = vector.broadcast %c0_i32_33 : i32 to vector<8x128xi32>
    %253 = arith.select %246, %251, %252 : vector<8x128xi1>, vector<8x128xi32>
    %c0_34 = arith.constant 0 : index
    %c0_35 = arith.constant 0 : index
    %254 = vector.load %arg6[%c0_34, %c0_35] : memref<8x128xi32, #tpu.memory_space<vmem>>, vector<8x128xi32>
    tpu.vector_store %arg6[%c0_34, %c0_35], %253 {strides = array<i32>} : memref<8x128xi32, #tpu.memory_space<vmem>>, vector<8x128xi32>,
    %255 = arith.subf %174, %191 : vector<8x128xf32>
    %c0_36 = arith.constant 0 : index
    %c0_37 = arith.constant 0 : index
    %c0_38 = arith.constant 0 : index
    %256 = vector.load %arg7[%c0_36, %c0_37, %c0_38] : memref<4x8x128xf32, #tpu.memory_space<vmem>>, vector<1x8x128xf32>
    %257 = vector.shape_cast %256 : vector<1x8x128xf32> to vector<8x128xf32>
    %258 = vector.shape_cast %255 : vector<8x128xf32> to vector<1x8x128xf32>
    tpu.vector_store %arg7[%c0_36, %c0_37, %c0_38], %258 {strides = array<i32>} : memref<4x8x128xf32, #tpu.memory_space<vmem>>, vector<1x8x128xf32>,
    %259 = arith.subf %176, %206 : vector<8x128xf32>
    %c1_39 = arith.constant 1 : index
    %c0_40 = arith.constant 0 : index
    %c0_41 = arith.constant 0 : index
    %260 = vector.load %arg7[%c1_39, %c0_40, %c0_41] : memref<4x8x128xf32, #tpu.memory_space<vmem>>, vector<1x8x128xf32>
    %261 = vector.shape_cast %260 : vector<1x8x128xf32> to vector<8x128xf32>
    %262 = vector.shape_cast %259 : vector<8x128xf32> to vector<1x8x128xf32>
    tpu.vector_store %arg7[%c1_39, %c0_40, %c0_41], %262 {strides = array<i32>} : memref<4x8x128xf32, #tpu.memory_space<vmem>>, vector<1x8x128xf32>,
    %263 = arith.addf %174, %221 : vector<8x128xf32>
    %c2_42 = arith.constant 2 : index
    %c0_43 = arith.constant 0 : index
    %c0_44 = arith.constant 0 : index
    %264 = vector.load %arg7[%c2_42, %c0_43, %c0_44] : memref<4x8x128xf32, #tpu.memory_space<vmem>>, vector<1x8x128xf32>
    %265 = vector.shape_cast %264 : vector<1x8x128xf32> to vector<8x128xf32>
    %266 = vector.shape_cast %263 : vector<8x128xf32> to vector<1x8x128xf32>
    tpu.vector_store %arg7[%c2_42, %c0_43, %c0_44], %266 {strides = array<i32>} : memref<4x8x128xf32, #tpu.memory_space<vmem>>, vector<1x8x128xf32>,
    %267 = arith.addf %176, %236 : vector<8x128xf32>
    %c3_45 = arith.constant 3 : index
    %c0_46 = arith.constant 0 : index
    %c0_47 = arith.constant 0 : index
    %268 = vector.load %arg7[%c3_45, %c0_46, %c0_47] : memref<4x8x128xf32, #tpu.memory_space<vmem>>, vector<1x8x128xf32>
    %269 = vector.shape_cast %268 : vector<1x8x128xf32> to vector<8x128xf32>
    %270 = vector.shape_cast %267 : vector<8x128xf32> to vector<1x8x128xf32>
    tpu.vector_store %arg7[%c3_45, %c0_46, %c0_47], %270 {strides = array<i32>} : memref<4x8x128xf32, #tpu.memory_space<vmem>>, vector<1x8x128xf32>,
    return
  }
  func.func @transform_0(%arg0: i32) -> (i32, i32, i32) {
    %c0_i32 = arith.constant 0 : i32
    %c0_i32_0 = arith.constant 0 : i32
    %c0_i32_1 = arith.constant 0 : i32
    return %c0_i32, %arg0, %c0_i32_0 : i32, i32, i32
  }
  func.func @transform_1(%arg0: i32) -> (i32, i32, i32) {
    %c0_i32 = arith.constant 0 : i32
    %c0_i32_0 = arith.constant 0 : i32
    %c0_i32_1 = arith.constant 0 : i32
    return %c0_i32, %arg0, %c0_i32_0 : i32, i32, i32
  }
  func.func @transform_2(%arg0: i32) -> i32 {
    %c0_i32 = arith.constant 0 : i32
    %c0_i32_0 = arith.constant 0 : i32
    return %c0_i32 : i32
  }
  func.func @transform_3(%arg0: i32) -> i32 {
    %c0_i32 = arith.constant 0 : i32
    %c0_i32_0 = arith.constant 0 : i32
    return %c0_i32 : i32
  }
  func.func @transform_4(%arg0: i32) -> (i32, i32) {
    %c0_i32 = arith.constant 0 : i32
    %c0_i32_0 = arith.constant 0 : i32
    return %arg0, %c0_i32 : i32, i32
  }
  func.func @transform_5(%arg0: i32) -> (i32, i32) {
    %c0_i32 = arith.constant 0 : i32
    %c0_i32_0 = arith.constant 0 : i32
    return %arg0, %c0_i32 : i32, i32
  }
  func.func @transform_6(%arg0: i32) -> (i32, i32, i32) {
    %c0_i32 = arith.constant 0 : i32
    %c0_i32_0 = arith.constant 0 : i32
    %c0_i32_1 = arith.constant 0 : i32
    return %c0_i32, %arg0, %c0_i32_0 : i32, i32, i32
  }
}

</mosaic_0001>

<llo_original>
// kernel: tile.9
$region0: #{tile.9}
  %s0 = inlined_call_operand.vmem [shape: f32[2,2,341], index: 0, kind: input, shape index: {}]
  %s1 = inlined_call_operand.vmem [shape: f32[2,682], index: 1, kind: output, shape index: {}]
  $region1: #{tile.9} parent=0
    #allocation0 [shape = 'u8[24576]{0}', space=vmem, size = 0x6000, scoped, tag = 'scoped mem for output reshape']
    #allocation1 [shape = 'u8[24576]{0}', space=vmem, size = 0x6000, scoped, tag = 'scoped mem for input reshape']
    %s3 = sshllo.u32 0, 2
    %s4 = smul.addr 2, 5
    %s5 = scalar_lea.vmem %s0, %s4
    %v6 = vld [vmem:[%s5] sm:%s3]
    %s7 = scalar_lea.vmem [#allocation1], 40
    %8 = vst [vmem:[%s7] sm:%s3] %v6
    %s9 = smul.addr 2, 4
    %s10 = scalar_lea.vmem %s0, %s9
    %v11 = vld [vmem:[%s10] sm:%s3]
    %s12 = scalar_lea.vmem [#allocation1], 32
    %13 = vst [vmem:[%s12] sm:%s3] %v11
    %s14 = smul.addr 2, 3
    %s15 = scalar_lea.vmem %s0, %s14
    %v16 = vld [vmem:[%s15] sm:%s3]
    %s17 = scalar_lea.vmem [#allocation1], 24
    %18 = vst [vmem:[%s17] sm:%s3] %v16
    %s19 = smul.addr 2, 2
    %s20 = scalar_lea.vmem %s0, %s19
    %v21 = vld [vmem:[%s20] sm:%s3]
    %s22 = scalar_lea.vmem [#allocation1], 16
    %23 = vst [vmem:[%s22] sm:%s3] %v21
    %s24 = scalar_lea.vmem %s0, 2
    %v25 = vld [vmem:[%s24] sm:%s3]
    %s26 = scalar_lea.vmem [#allocation1], 8
    %27 = vst [vmem:[%s26] sm:%s3] %v25
    %v28 = vld [vmem:[%s0] sm:%s3]
    %29 = vst [vmem:[#allocation1] sm:%s3] %v28
    %s30 = scalar_lea.vmem [#allocation1], 16
    %s31 = smov 3
    %v32 = vld [vmem:[%s30] ss:$24 sm:%s31]
    %vm33 = vcmask 695296
    %s34 = scalar_lea.vmem [#allocation0], 16
    %35 = vst.msk [vmem:[%s34] sm:$0x3] %vm33, %v32
    %s36 = smov 3
    %v37 = vld [vmem:[#allocation1] ss:$8 sm:%s36]
    %38 = vst [vmem:[#allocation0] ss:$8 sm:$0x3] %v37
    %s39 = scalar_lea.vmem [#allocation1], 24
    %s40 = smov 3
    %v41 = vld [vmem:[%s39] ss:$8 sm:%s40]
    %s42 = scalar_lea.vmem [#allocation0], 1
    %43 = vst [vmem:[%s42] ss:$8 sm:$0x3] %v41
    %s44 = scalar_lea.vmem [#allocation1], 17
    %s45 = smov 3
    %v46 = vld [vmem:[%s44] ss:$24 sm:%s45]
    %s47 = scalar_lea.vmem [#allocation1], 17
    %s48 = smov 3
    %v49 = vld [vmem:[%s47] ss:$24 sm:%s48]
    %s50 = scalar_lea.vmem [#allocation1], 4294967249
    %s51 = smov 12
    %v52 = vld [vmem:[%s50] ss:$24 sm:%s51]
    %vm53 = vcmask 1043458
    %v54 = vsel %vm53, %v52, %v49
    %s55 = scalar_lea.vmem [#allocation1], 4294967209
    %s56 = smov 48
    %v57 = vld [vmem:[%s55] ss:$24 sm:%s56]
    %vm58 = vcmask 1045508
    %v59 = vsel %vm58, %v57, %v54
    %vm60 = vcmask 351232
    %v61 = vsel %vm60, %v59, %v46
    %62 = vrot.lane.b32.xlu0 %v61, 85
    %v63 = vpop.permute.xlu0 %62
    %vm64 = vcmask 343040
    %s65 = scalar_lea.vmem [#allocation0], 40
    %66 = vst.msk [vmem:[%s65] sm:$0x3] %vm64, %v63
    %vm67 = vcmask 1048232
    %s68 = scalar_lea.vmem [#allocation0], 32
    %69 = vst.msk [vmem:[%s68] sm:$0x3] %vm67, %v63
    %s70 = scalar_lea.vmem [#allocation0], 14
    %71 = vst.msk [vmem:[%s70] sm:$0xc] %vm67, %v63
    %s72 = scalar_lea.vmem [#allocation0], 20
    %73 = vst.msk [vmem:[%s72] sm:$0x30] %vm67, %v63
    %s74 = scalar_lea.vmem [#allocation1], 9
    %s75 = smov 3
    %v76 = vld [vmem:[%s74] ss:$24 sm:%s75]
    %s77 = scalar_lea.vmem [#allocation1], 4294967249
    %s78 = smov 12
    %v79 = vld [vmem:[%s77] ss:$24 sm:%s78]
    %vm80 = vcmask 1043458
    %v81 = vsel %vm80, %v79, %v76
    %82 = vrot.lane.b32.xlu0 %v81, 85
    %v83 = vpop.permute.xlu0 %82
    %vm84 = vcmask 695296
    %s85 = scalar_lea.vmem [#allocation0], 32
    %86 = vst.msk [vmem:[%s85] sm:$0x3] %vm84, %v83
    %s87 = scalar_lea.vmem [#allocation0], 22
    %88 = vst.msk [vmem:[%s87] sm:$0xc] %vm84, %v83
    %s90 = sshllo.u32 0, 2
    %v92 = vld [vmem:[#allocation0] sm:%s90]
    %s93 = sshllo.u32 0, 2
    %94 = vst [vmem:[%s1] sm:%s93] %v92
    %s95 = scalar_lea.vmem [#allocation0], 8
    %v96 = vld [vmem:[%s95] sm:%s90]
    %s97 = sshllo.u32 0, 2
    %s98 = scalar_lea.vmem %s1, 2
    %99 = vst [vmem:[%s98] sm:%s97] %v96
    %s100 = scalar_lea.vmem [#allocation0], 16
    %v101 = vld [vmem:[%s100] sm:%s90]
    %s102 = sshllo.u32 0, 2
    %s103 = smul.addr 2, 2
    %s104 = scalar_lea.vmem %s1, %s103
    %105 = vst [vmem:[%s104] sm:%s102] %v101
    %s106 = scalar_lea.vmem [#allocation0], 24
    %v107 = vld [vmem:[%s106] sm:%s90]
    %s108 = sshllo.u32 0, 2
    %s109 = smul.addr 2, 3
    %s110 = scalar_lea.vmem %s1, %s109
    %111 = vst [vmem:[%s110] sm:%s108] %v107
    %s112 = scalar_lea.vmem [#allocation0], 32
    %v113 = vld [vmem:[%s112] sm:%s90]
    %s114 = sshllo.u32 0, 2
    %s115 = smul.addr 2, 4
    %s116 = scalar_lea.vmem %s1, %s115
    %117 = vst [vmem:[%s116] sm:%s114] %v113
    %s118 = scalar_lea.vmem [#allocation0], 40
    %v119 = vld [vmem:[%s118] sm:%s90]
    %s120 = sshllo.u32 0, 2
    %s121 = smul.addr 2, 5
    %s122 = scalar_lea.vmem %s1, %s121
    %123 = vst [vmem:[%s122] sm:%s120] %v119

// kernel: fcos_detector_inference.1
$region0: #{fcos_detector_inference.1}
  #allocation0 [shape = 'u32[]', space=smem, size = 0x4, offset = 0x4, fixed_abs, tag = 'smem constant byte address 0x4 - core index']
  #allocation1 [shape = 'u32[144,128]{1,0:T(1,128)}', space=vmem, size = 0x12000, scoped, tag = 'internal scratch']
  %s0 = inlined_call_operand.vmem [shape: f32[3,8,128], index: 0, kind: input, shape index: {}]
  %s1 = inlined_call_operand.vmem [shape: f32[2,8,128], index: 1, kind: input, shape index: {}]
  %s2 = inlined_call_operand.vmem [shape: f32[39], index: 2, kind: input, shape index: {}]
  %s3 = inlined_call_operand.vmem [shape: f32[13], index: 3, kind: input, shape index: {}]
  %s4 = inlined_call_operand.vmem [shape: f32[8,128], index: 4, kind: output, shape index: {0}]
  %s5 = inlined_call_operand.vmem [shape: s32[8,128], index: 5, kind: output, shape index: {1}]
  %s6 = inlined_call_operand.vmem [shape: f32[4,8,128], index: 6, kind: output, shape index: {2}]
  %7 = xla_tuple %s4, %s5, %s6
  %s8 = sld [smem:[#allocation0]]
  $region50: #{fcos_detector_inference.1} parent=0
    _
  %s10 = ssub.s32 1, %s8
  %s11 = scalar_select 0, %s10, %s8
  $region1: #{fcos_detector_inference.1} parent=0
    #allocation2 [shape = 'u8[512]{0}', space=smem, size = 0x200, scoped, tag = 'input window, operand 2, single buffered']
    #allocation3 [shape = 's32[1]{0}', space=sflag, size = 0x4, scoped, tag = 'scoped memory for fcos_detector_inference.1']
    #allocation4 [shape = 'u8[512]{0}', space=smem, size = 0x200, scoped, tag = 'input window, operand 3, single buffered']
    #allocation5 [shape = 's32[1]{0}', space=sflag, size = 0x4, scoped, tag = 'scoped memory for fcos_detector_inference.1']
    %12 = vsyncpa [#allocation3], 0
    %13 = vsyncpa [#allocation5], 0
    // Predicated region
    $region2: #{fcos_detector_inference.1} parent=1 // pred_check
      _
    $region3: #{fcos_detector_inference.1} parent=1 // pred_check_branch
      %15 = sbr.rel (0) target = $region5
    $region4: #{fcos_detector_inference.1} parent=1 // pred_region
      _
    $region5: #{fcos_detector_inference.1} parent=1 // pred_fallthru
      _
    // Predicated region
    $region6: #{fcos_detector_inference.1} parent=1 // pred_check
      _
    $region7: #{fcos_detector_inference.1} parent=1 // pred_check_branch
      %17 = sbr.rel (0) target = $region9
    $region8: #{fcos_detector_inference.1} parent=1 // pred_region
      _
    $region9: #{fcos_detector_inference.1} parent=1 // pred_fallthru
      _
    // Predicated region
    $region10: #{fcos_detector_inference.1} parent=1 // pred_check
      _
    $region11: #{fcos_detector_inference.1} parent=1 // pred_check_branch
      %19 = sbr.rel (0) target = $region13
    $region12: #{fcos_detector_inference.1} parent=1 // pred_region
      %s21 = ssub.s32 16, 16
      %22 = vsyncadd [#allocation3], %s21
      %s24 = sshll.u32 %s2, 4
      %s25 = int_to_ptr.vmem [resolvable:$true] %s24
      %27 = dma.vmem_to_smem %s25, 16, [#allocation2], [#allocation3]
    $region13: #{fcos_detector_inference.1} parent=1 // pred_fallthru
      _
    // Predicated region
    $region14: #{fcos_detector_inference.1} parent=1 // pred_check
      _
    $region15: #{fcos_detector_inference.1} parent=1 // pred_check_branch
      %29 = sbr.rel (0) target = $region17
    $region16: #{fcos_detector_inference.1} parent=1 // pred_region
      %s31 = ssub.s32 16, 16
      %32 = vsyncadd [#allocation5], %s31
      %s34 = sshll.u32 %s3, 4
      %s35 = int_to_ptr.vmem [resolvable:$true] %s34
      %37 = dma.vmem_to_smem %s35, 16, [#allocation4], [#allocation5]
    $region17: #{fcos_detector_inference.1} parent=1 // pred_fallthru
      _
    // Predicated region
    $region18: #{fcos_detector_inference.1} parent=1 // pred_check
      _
    $region19: #{fcos_detector_inference.1} parent=1 // pred_check_branch
      %39 = sbr.rel (0) target = $region21
    $region20: #{fcos_detector_inference.1} parent=1 // pred_region
      %40 = dma.done [#allocation3], 16
    $region21: #{fcos_detector_inference.1} parent=1 // pred_fallthru
      _
    // Predicated region
    $region22: #{fcos_detector_inference.1} parent=1 // pred_check
      _
    $region23: #{fcos_detector_inference.1} parent=1 // pred_check_branch
      %42 = sbr.rel (0) target = $region25
    $region24: #{fcos_detector_inference.1} parent=1 // pred_region
      %43 = dma.done [#allocation5], 16
    $region25: #{fcos_detector_inference.1} parent=1 // pred_fallthru
      _
    %44 = sfence
    %v45 = vld [vmem:[%s0] sm:$0xff]
    %s46 = scalar_lea.vmem %s0, 8
    %v47 = vld [vmem:[%s46] sm:$0xff]
    %s48 = scalar_lea.vmem %s0, 16
    %v49 = vld [vmem:[%s48] sm:$0xff]
    %s50 = sld [smem:[#allocation2]]
    %v51 = vstv %s50
    %v52 = vmul.f32 %v51, %v45
    %s53 = sld [smem:[#allocation2 + $0x1]]
    %v54 = vstv %s53
    %v55 = vmul.f32 %v54, %v47
    %v56 = vadd.f32 %v52, %v55
    %s57 = sld [smem:[#allocation2 + $0x2]]
    %v58 = vstv %s57
    %v59 = vmul.f32 %v58, %v49
    %v60 = vadd.f32 %v56, %v59
    %s61 = sld [smem:[#allocation4]]
    %v62 = vstv %s61
    %v63 = vadd.f32 %v60, %v62
    %s64 = sld [smem:[#allocation2 + $0x3]]
    %v65 = vstv %s64
    %v66 = vmul.f32 %v65, %v45
    %s67 = sld [smem:[#allocation2 + $0x4]]
    %v68 = vstv %s67
    %v69 = vmul.f32 %v68, %v47
    %v70 = vadd.f32 %v66, %v69
    %s71 = sld [smem:[#allocation2 + $0x5]]
    %v72 = vstv %s71
    %v73 = vmul.f32 %v72, %v49
    %v74 = vadd.f32 %v70, %v73
    %s75 = sld [smem:[#allocation4 + $0x1]]
    %v76 = vstv %s75
    %v77 = vadd.f32 %v74, %v76
    %vm78 = vcmp.gt.f32.partialorder %v77, %v63
    %v79 = vsel %vm78, 1, 0
    %v80 = vsel %vm78, %v77, %v63
    %s81 = sld [smem:[#allocation2 + $0x6]]
    %v82 = vstv %s81
    %v83 = vmul.f32 %v82, %v45
    %s84 = sld [smem:[#allocation2 + $0x7]]
    %v85 = vstv %s84
    %v86 = vmul.f32 %v85, %v47
    %v87 = vadd.f32 %v83, %v86
    %s88 = sld [smem:[#allocation2 + $0x8]]
    %v89 = vstv %s88
    %v90 = vmul.f32 %v89, %v49
    %v91 = vadd.f32 %v87, %v90
    %s92 = sld [smem:[#allocation4 + $0x2]]
    %v93 = vstv %s92
    %v94 = vadd.f32 %v91, %v93
    %vm95 = vcmp.gt.f32.partialorder %v94, %v80
    %v96 = vsel %vm95, 2, %v79
    %v97 = vsel %vm95, %v94, %v80
    %s98 = sld [smem:[#allocation2 + $0x9]]
    %v99 = vstv %s98
    %v100 = vmul.f32 %v99, %v45
    %s101 = sld [smem:[#allocation2 + $0xa]]
    %v102 = vstv %s101
    %v103 = vmul.f32 %v102, %v47
    %v104 = vadd.f32 %v100, %v103
    %s105 = sld [smem:[#allocation2 + $0xb]]
    %v106 = vstv %s105
    %v107 = vmul.f32 %v106, %v49
    %v108 = vadd.f32 %v104, %v107
    %s109 = sld [smem:[#allocation4 + $0x3]]
    %v110 = vstv %s109
    %v111 = vadd.f32 %v108, %v110
    %vm112 = vcmp.gt.f32.partialorder %v111, %v97
    %v113 = vsel %vm112, 3, %v96
    %v114 = vsel %vm112, %v111, %v97
    %s115 = sld [smem:[#allocation2 + $0xc]]
    %v116 = vstv %s115
    %v117 = vmul.f32 %v116, %v45
    %s118 = sld [smem:[#allocation2 + $0xd]]
    %v119 = vstv %s118
    %v120 = vmul.f32 %v119, %v47
    %v121 = vadd.f32 %v117, %v120
    %s122 = sld [smem:[#allocation2 + $0xe]]
    %v123 = vstv %s122
    %v124 = vmul.f32 %v123, %v49
    %v125 = vadd.f32 %v121, %v124
    %s126 = sld [smem:[#allocation4 + $0x4]]
    %v127 = vstv %s126
    %v128 = vadd.f32 %v125, %v127
    %vm129 = vcmp.gt.f32.partialorder %v128, %v114
    %v130 = vsel %vm129, 4, %v113
    %v131 = vsel %vm129, %v128, %v114
    %s132 = sld [smem:[#allocation2 + $0xf]]
    %v133 = vstv %s132
    %v134 = vmul.f32 %v133, %v45
    %s135 = sld [smem:[#allocation2 + $0x10]]
    %v136 = vstv %s135
    %v137 = vmul.f32 %v136, %v47
    %v138 = vadd.f32 %v134, %v137
    %s139 = sld [smem:[#allocation2 + $0x11]]
    %v140 = vstv %s139
    %v141 = vmul.f32 %v140, %v49
    %v142 = vadd.f32 %v138, %v141
    %s143 = sld [smem:[#allocation4 + $0x5]]
    %v144 = vstv %s143
    %v145 = vadd.f32 %v142, %v144
    %vm146 = vcmp.gt.f32.partialorder %v145, %v131
    %v147 = vsel %vm146, 5, %v130
    %v148 = vsel %vm146, %v145, %v131
    %s149 = sld [smem:[#allocation2 + $0x12]]
    %v150 = vstv %s149
    %v151 = vmul.f32 %v150, %v45
    %s152 = sld [smem:[#allocation2 + $0x13]]
    %v153 = vstv %s152
    %v154 = vmul.f32 %v153, %v47
    %v155 = vadd.f32 %v151, %v154
    %s156 = sld [smem:[#allocation2 + $0x14]]
    %v157 = vstv %s156
    %v158 = vmul.f32 %v157, %v49
    %v159 = vadd.f32 %v155, %v158
    %s160 = sld [smem:[#allocation4 + $0x6]]
    %v161 = vstv %s160
    %v162 = vadd.f32 %v159, %v161
    %vm163 = vcmp.gt.f32.partialorder %v162, %v148
    %v164 = vsel %vm163, 6, %v147
    %v165 = vsel %vm163, %v162, %v148
    %s166 = sld [smem:[#allocation2 + $0x15]]
    %v167 = vstv %s166
    %v168 = vmul.f32 %v167, %v45
    %s169 = sld [smem:[#allocation2 + $0x16]]
    %v170 = vstv %s169
    %v171 = vmul.f32 %v170, %v47
    %v172 = vadd.f32 %v168, %v171
    %s173 = sld [smem:[#allocation2 + $0x17]]
    %v174 = vstv %s173
    %v175 = vmul.f32 %v174, %v49
    %v176 = vadd.f32 %v172, %v175
    %s177 = sld [smem:[#allocation4 + $0x7]]
    %v178 = vstv %s177
    %v179 = vadd.f32 %v176, %v178
    %vm180 = vcmp.gt.f32.partialorder %v179, %v165
    %v181 = vsel %vm180, 7, %v164
    %v182 = vsel %vm180, %v179, %v165
    %v183 = vxor.u32 %v182, 2147483648
    %v184 = vmul.f32 %v183, 1.442695
    %v185 = vpow.pop %v184
    %v186 = vadd.f32 %v185, 1.0
    %v187 = vrcp.pop %v186
    %v188 = vmul.f32 1.0, %v187
    %s189 = sld [smem:[#allocation2 + $0x18]]
    %v190 = vstv %s189
    %v191 = vmul.f32 %v190, %v45
    %s192 = sld [smem:[#allocation2 + $0x19]]
    %v193 = vstv %s192
    %v194 = vmul.f32 %v193, %v47
    %v195 = vadd.f32 %v191, %v194
    %s196 = sld [smem:[#allocation2 + $0x1a]]
    %v197 = vstv %s196
    %v198 = vmul.f32 %v197, %v49
    %v199 = vadd.f32 %v195, %v198
    %s200 = sld [smem:[#allocation4 + $0x8]]
    %v201 = vstv %s200
    %v202 = vadd.f32 %v199, %v201
    %v203 = vxor.u32 %v202, 2147483648
    %v204 = vmul.f32 %v203, 1.442695
    %v205 = vpow.pop %v204
    %v206 = vadd.f32 %v205, 1.0
    %v207 = vrcp.pop %v206
    %v208 = vmul.f32 1.0, %v207
    %v209 = vmul.f32 %v188, %v208
    %v210 = vrsqrt.pop %v209
    %v211 = vmul.f32 %v209, %v210
    %vm212 = vcmp.eq.f32.partialorder %v209, inf
    %v213 = vsel %vm212, %v209, %v211
    %vm214 = vcmp.eq.f32.partialorder %v209, 0.0
    %v215 = vand.u32 %v209, 2147483648
    %v216 = vsel %vm214, %v215, %v213
    %v217 = vld [vmem:[%s1] sm:$0xff]
    %s218 = scalar_lea.vmem %s1, 8
    %v219 = vld [vmem:[%s218] sm:$0xff]
    %s220 = sld [smem:[#allocation2 + $0x1b]]
    %v221 = vstv %s220
    %v222 = vmul.f32 %v221, %v45
    %s223 = sld [smem:[#allocation2 + $0x1c]]
    %v224 = vstv %s223
    %v225 = vmul.f32 %v224, %v47
    %v226 = vadd.f32 %v222, %v225
    %s227 = sld [smem:[#allocation2 + $0x1d]]
    %v228 = vstv %s227
    %v229 = vmul.f32 %v228, %v49
    %v230 = vadd.f32 %v226, %v229
    %s231 = sld [smem:[#allocation4 + $0x9]]
    %v232 = vstv %s231
    %v233 = vadd.f32 %v230, %v232
    %v234 = vmul.f32 %v233, 1.442695
    %v235 = vpow.pop %v234
    %s236 = sld [smem:[#allocation2 + $0x1e]]
    %v237 = vstv %s236
    %v238 = vmul.f32 %v237, %v45
    %s239 = sld [smem:[#allocation2 + $0x1f]]
    %v240 = vstv %s239
    %v241 = vmul.f32 %v240, %v47
    %v242 = vadd.f32 %v238, %v241
    %s243 = sld [smem:[#allocation2 + $0x20]]
    %v244 = vstv %s243
    %v245 = vmul.f32 %v244, %v49
    %v246 = vadd.f32 %v242, %v245
    %s247 = sld [smem:[#allocation4 + $0xa]]
    %v248 = vstv %s247
    %v249 = vadd.f32 %v246, %v248
    %v250 = vmul.f32 %v249, 1.442695
    %v251 = vpow.pop %v250
    %s252 = sld [smem:[#allocation2 + $0x21]]
    %v253 = vstv %s252
    %v254 = vmul.f32 %v253, %v45
    %s255 = sld [smem:[#allocation2 + $0x22]]
    %v256 = vstv %s255
    %v257 = vmul.f32 %v256, %v47
    %v258 = vadd.f32 %v254, %v257
    %s259 = sld [smem:[#allocation2 + $0x23]]
    %v260 = vstv %s259
    %v261 = vmul.f32 %v260, %v49
    %v262 = vadd.f32 %v258, %v261
    %s263 = sld [smem:[#allocation4 + $0xb]]
    %v264 = vstv %s263
    %v265 = vadd.f32 %v262, %v264
    %v266 = vmul.f32 %v265, 1.442695
    %v267 = vpow.pop %v266
    %s268 = sld [smem:[#allocation2 + $0x24]]
    %v269 = vstv %s268
    %v270 = vmul.f32 %v269, %v45
    %s271 = sld [smem:[#allocation2 + $0x25]]
    %v272 = vstv %s271
    %v273 = vmul.f32 %v272, %v47
    %v274 = vadd.f32 %v270, %v273
    %s275 = sld [smem:[#allocation2 + $0x26]]
    %v276 = vstv %s275
    %v277 = vmul.f32 %v276, %v49
    %v278 = vadd.f32 %v274, %v277
    %s279 = sld [smem:[#allocation4 + $0xc]]
    %v280 = vstv %s279
    %v281 = vadd.f32 %v278, %v280
    %v282 = vmul.f32 %v281, 1.442695
    %v283 = vpow.pop %v282
    %s284 = smul.u32 0, 1024
    %v285 = vlaneseq
    %v286 = vshrl.u32 %v285, 7
    %v287 = vlaneseq
    %v288 = vand.u32 %v287, 127
    %v289 = vmul.u32 %v286, 128
    %v290 = vstv %s284
    %v291 = vadd.s32 %v290, %v289
    %v292 = vadd.s32 %v291, %v288
    %vm293 = vcmp.lt.s32.totalorder %v292, 682
    %v294 = vsel %vm293, %v216, -1.0
    %295 = vst [vmem:[%s4] sm:$0xff] %v294
    %v296 = vadd.s32 %v181, 1
    %v297 = vsel %vm293, %v296, 0
    %298 = vst [vmem:[%s5] sm:$0xff] %v297
    %v299 = vsub.f32 %v217, %v235
    %300 = vst [vmem:[%s6] sm:$0xff] %v299
    %v301 = vsub.f32 %v219, %v251
    %s302 = scalar_lea.vmem %s6, 8
    %303 = vst [vmem:[%s302] sm:$0xff] %v301
    %v304 = vadd.f32 %v217, %v267
    %s305 = scalar_lea.vmem %s6, 16
    %306 = vst [vmem:[%s305] sm:$0xff] %v304
    %v307 = vadd.f32 %v219, %v283
    %s308 = scalar_lea.vmem %s6, 24
    %309 = vst [vmem:[%s308] sm:$0xff] %v307
    // Predicated region
    $region26: #{fcos_detector_inference.1} parent=1 // pred_check
      _
    $region27: #{fcos_detector_inference.1} parent=1 // pred_check_branch
      %311 = sbr.rel (0) target = $region29
    $region28: #{fcos_detector_inference.1} parent=1 // pred_region
      _
    $region29: #{fcos_detector_inference.1} parent=1 // pred_fallthru
      _
    // Predicated region
    $region30: #{fcos_detector_inference.1} parent=1 // pred_check
      _
    $region31: #{fcos_detector_inference.1} parent=1 // pred_check_branch
      %313 = sbr.rel (0) target = $region33
    $region32: #{fcos_detector_inference.1} parent=1 // pred_region
      _
    $region33: #{fcos_detector_inference.1} parent=1 // pred_fallthru
      _
    // Predicated region
    $region34: #{fcos_detector_inference.1} parent=1 // pred_check
      _
    $region35: #{fcos_detector_inference.1} parent=1 // pred_check_branch
      %315 = sbr.rel (0) target = $region37
    $region36: #{fcos_detector_inference.1} parent=1 // pred_region
      _
    $region37: #{fcos_detector_inference.1} parent=1 // pred_fallthru
      _
    // Predicated region
    $region38: #{fcos_detector_inference.1} parent=1 // pred_check
      _
    $region39: #{fcos_detector_inference.1} parent=1 // pred_check_branch
      %317 = sbr.rel (0) target = $region41
    $region40: #{fcos_detector_inference.1} parent=1 // pred_region
      _
    $region41: #{fcos_detector_inference.1} parent=1 // pred_fallthru
      _
    // Predicated region
    $region42: #{fcos_detector_inference.1} parent=1 // pred_check
      _
    $region43: #{fcos_detector_inference.1} parent=1 // pred_check_branch
      %319 = sbr.rel (0) target = $region45
    $region44: #{fcos_detector_inference.1} parent=1 // pred_region
      _
    $region45: #{fcos_detector_inference.1} parent=1 // pred_fallthru
      _
    // Predicated region
    $region46: #{fcos_detector_inference.1} parent=1 // pred_check
      _
    $region47: #{fcos_detector_inference.1} parent=1 // pred_check_branch
      %321 = sbr.rel (0) target = $region49
    $region48: #{fcos_detector_inference.1} parent=1 // pred_region
      _
    $region49: #{fcos_detector_inference.1} parent=1 // pred_fallthru
      _
    %322 = vsyncpa [#allocation3], 1
    %323 = vsyncpa [#allocation5], 1

</llo_original>
